<compile_context>
chip_gen: v7x
topology: tpu7x:2x2x1
jax: 0.10.0
libtpu: 0.0.40
codegen_flags: <defaults>
</compile_context>

<pallas_src>
import functools

import jax
import jax.numpy as jnp
from jax.experimental import pallas as pl
from jax.experimental.pallas import tpu as pltpu

_LANE = 128         # lanes per row (fast axis)
_BLOCK_ROWS = 8192  # rows per grid step: 8192*128*4B = 4 MiB per f32 input block
_N_SPLITS = 2       # leading "parallel" axis -> megacore split on v7x


def _focal_loss_kernel(x_ref, t_ref, out_ref, *,
                       steps, n_blocks, block_rows, n_rows,
                       hard_targets, needs_mask):
    j = pl.program_id(0)   # split index (parallel)
    k = pl.program_id(1)   # step within split (arbitrary / reduction)

    @pl.when(k == 0)
    def _init():
        out_ref[...] = jnp.zeros_like(out_ref)

    # Cast probabilities in VMEM (inputs may arrive bf16); compute in f32.
    p = x_ref[...].astype(jnp.float32)

    if hard_targets:
        # Hard 0/1 targets: one log per element instead of two.
        sel = t_ref[...] >= 0.5
        bce = -jnp.maximum(jnp.log(jnp.where(sel, p, 1.0 - p)), -100.0)
    else:
        # Soft targets: exact two-log BCE (torch clamps log terms at -100).
        t = t_ref[...].astype(jnp.float32)
        log_p = jnp.maximum(jnp.log(p), -100.0)
        log_1mp = jnp.maximum(jnp.log(1.0 - p), -100.0)
        bce = -(log_1mp + t * (log_p - log_1mp))

    if needs_mask:
        gblk = j * steps + k   # global row-block index (may overshoot n_blocks-1)

        @pl.when(gblk < n_blocks - 1)
        def _full():
            out_ref[0:1, :] += jnp.sum(bce, axis=0, keepdims=True)

        @pl.when(gblk >= n_blocks - 1)
        def _tail():
            # Only the last (possibly partial) block and clamped overshoot
            # steps pay for the iota row mask.
            row = (jax.lax.broadcasted_iota(jnp.int32, bce.shape, 0)
                   + gblk * block_rows)
            masked = jnp.where(row < n_rows, bce, 0.0)
            out_ref[0:1, :] += jnp.sum(masked, axis=0, keepdims=True)
    else:
        out_ref[0:1, :] += jnp.sum(bce, axis=0, keepdims=True)


def focal_loss(inputs, targets, alpha=0.8, gamma=2, smooth=1, *,
               block_rows=None, hard_targets=None):
    # TODO(synk): `smooth` is accepted but unused, matching the PyTorch module.
    x = inputs.reshape(-1)
    t = targets.reshape(-1)
    n = x.shape[0]

    if hard_targets is None:
        hard_targets = bool(jnp.issubdtype(t.dtype, jnp.integer)
                            or jnp.issubdtype(t.dtype, jnp.bool_))
    hard_targets = bool(hard_targets)

    if not jnp.issubdtype(x.dtype, jnp.floating):
        x = x.astype(jnp.float32)
    if hard_targets:
        # 0/1 exactly representable in bf16; halves (vs f32) the target stream.
        t = t.astype(jnp.bfloat16)
    elif not jnp.issubdtype(t.dtype, jnp.floating):
        t = t.astype(jnp.float32)

    # Minimal pad (< 128 elements) so the flat vector reshapes to a lane-dense
    # (rows, 128) slab. (p=1, t=1) contributes exactly 0 to the BCE sum, and we
    # divide by the original element count, so semantics are unchanged.
    rem = n % _LANE
    if rem:
        pad = _LANE - rem
        x = jnp.concatenate([x, jnp.ones((pad,), x.dtype)])
        t = jnp.concatenate([t, jnp.ones((pad,), t.dtype)])

    rows = x.shape[0] // _LANE
    x2 = x.reshape(rows, _LANE)
    t2 = t.reshape(rows, _LANE)

    if block_rows is None:
        block_rows = _BLOCK_ROWS
    block_rows = min(block_rows, rows)
    if block_rows < rows:
        block_rows = max(8, (block_rows // 8) * 8)   # keep (8,128)-aligned tiles

    n_blocks = pl.cdiv(rows, block_rows)
    n_splits = _N_SPLITS if n_blocks >= _N_SPLITS else 1
    steps = pl.cdiv(n_blocks, n_splits)
    has_tail = (rows % block_rows) != 0
    has_overshoot = (n_splits * steps) != n_blocks
    needs_mask = has_tail or has_overshoot

    kernel = functools.partial(
        _focal_loss_kernel,
        steps=steps,
        n_blocks=n_blocks,
        block_rows=block_rows,
        n_rows=rows,
        hard_targets=hard_targets,
        needs_mask=needs_mask,
    )

    def in_map(j, k):
        # Clamp overshoot steps of the last split to the final valid block;
        # their contribution is masked to zero in-kernel.
        return (jnp.minimum(j * steps + k, n_blocks - 1), 0)

    bytes_in = (x2.size * x2.dtype.itemsize) + (t2.size * t2.dtype.itemsize)
    cost = pl.CostEstimate(
        flops=(4 if hard_targets else 6) * n,
        transcendentals=(1 if hard_targets else 2) * n,
        bytes_accessed=bytes_in + n_splits * 8 * _LANE * 4,
    )

    partials = pl.pallas_call(
        kernel,
        out_shape=jax.ShapeDtypeStruct((n_splits * 8, _LANE), jnp.float32),
        grid_spec=pltpu.PrefetchScalarGridSpec(
            num_scalar_prefetch=0,
            grid=(n_splits, steps),
            in_specs=[
                pl.BlockSpec((block_rows, _LANE), in_map),
                pl.BlockSpec((block_rows, _LANE), in_map),
            ],
            out_specs=pl.BlockSpec((8, _LANE), lambda j, k: (j, 0)),
        ),
        compiler_params=pltpu.CompilerParams(
            dimension_semantics=("parallel", "arbitrary"),
            # 8192-row f32 blocks double-buffered for 2 inputs ~= 16 MiB, which
            # collides with v5e's 16 MiB default scoped-VMEM limit; raise it.
            vmem_limit_bytes=32 * 1024 * 1024,
        ),
        cost_estimate=cost,
    )(x2, t2)

    # Finalize in the wrapper: single lane-reduce + focal formula.
    bce_mean = jnp.sum(partials) / jnp.float32(n)
    bce_exp = jnp.exp(-bce_mean)
    return alpha * (1.0 - bce_exp) ** gamma * bce_mean


def _focal_loss_ref(inputs, targets, alpha=0.8, gamma=2):
    p = inputs.reshape(-1).astype(jnp.float32)
    t = targets.reshape(-1).astype(jnp.float32)
    log_p = jnp.maximum(jnp.log(p), -100.0)
    log_1mp = jnp.maximum(jnp.log(1.0 - p), -100.0)
    bce = jnp.mean(-(t * log_p + (1.0 - t) * log_1mp))
    return alpha * (1.0 - jnp.exp(-bce)) ** gamma * bce


if __name__ == "__main__":
    key = jax.random.PRNGKey(0)
    k1, k2, k3, k4, k5, k6, k7, k8 = jax.random.split(key, 8)

    # Main case: NCHW probabilities, matches the PyTorch usage (soft/f32 path).
    B, C, H, W = 2, 4, 16, 16
    inputs = jax.nn.sigmoid(jax.random.normal(k1, (B, C, H, W), jnp.float32))
    targets = (jax.random.uniform(k2, (B, C, H, W)) > 0.5).astype(jnp.float32)
    loss = jax.block_until_ready(focal_loss(inputs, targets))
    ref = _focal_loss_ref(inputs, targets)
    assert jnp.allclose(loss, ref, rtol=1e-5, atol=1e-6), (loss, ref)

    # Ragged case: size not a multiple of 128 (exercises the minimal lane pad).
    inputs2 = jax.nn.sigmoid(jax.random.normal(k3, (3, 5, 7, 11), jnp.float32))
    targets2 = (jax.random.uniform(k4, (3, 5, 7, 11)) > 0.5).astype(jnp.float32)
    loss2 = jax.block_until_ready(focal_loss(inputs2, targets2))
    ref2 = _focal_loss_ref(inputs2, targets2)
    assert jnp.allclose(loss2, ref2, rtol=1e-5, atol=1e-6), (loss2, ref2)

    # Multi-block case with a small block size: exercises the 2-way split
    # (parallel axis), the partial tail block mask, and the overshoot clamp.
    inputs3 = jax.nn.sigmoid(jax.random.normal(k5, (1, 1, 1030, 128), jnp.float32))
    targets3 = (jax.random.uniform(k6, (1, 1, 1030, 128)) > 0.5).astype(jnp.float32)
    loss3 = jax.block_until_ready(focal_loss(inputs3, targets3, block_rows=256))
    ref3 = _focal_loss_ref(inputs3, targets3)
    assert jnp.allclose(loss3, ref3, rtol=1e-5, atol=1e-6), (loss3, ref3)

    # Hard-target case: bool targets (bf16 stream + single-log path) with
    # bf16 probabilities (dtype-preserving input stream), multi-block.
    inputs4 = jax.nn.sigmoid(
        jax.random.normal(k7, (1, 1, 640, 128), jnp.float32)).astype(jnp.bfloat16)
    targets4 = jax.random.uniform(k8, (1, 1, 640, 128)) > 0.5   # bool
    loss4 = jax.block_until_ready(focal_loss(inputs4, targets4, block_rows=128))
    ref4 = _focal_loss_ref(inputs4, targets4)
    assert jnp.allclose(loss4, ref4, rtol=1e-5, atol=1e-6), (loss4, ref4)

    print("KERNEL_OK")
</pallas_src>

<mosaic_0001>
module attributes {stable_mosaic.version = 11 : i64} {
  func.func @_focal_loss_kernel(%arg0: i32, %arg1: i32, %arg2: memref<16x128xf32, #tpu.memory_space<vmem>>, %arg3: memref<16x128xf32, #tpu.memory_space<vmem>>, %arg4: memref<8x128xf32, #tpu.memory_space<vmem>>) attributes {dimension_semantics = [#tpu.dimension_semantics<parallel>, #tpu.dimension_semantics<arbitrary>], iteration_bounds = array<i64: 1, 1>, scalar_prefetch = 0 : i64, scratch_operands = 0 : i64, tpu.core_type = #tpu.core_type<tc>, window_params = [{transform_indices = @transform_0, window_bounds = array<i64: 16, 128>}, {transform_indices = @transform_1, window_bounds = array<i64: 16, 128>}, {transform_indices = @transform_2, window_bounds = array<i64: 8, 128>}]} {
    %c0_i32 = arith.constant 0 : i32
    %0 = arith.cmpi eq, %arg1, %c0_i32 : i32
    %1 = arith.extui %0 : i1 to i32
    %c0_i32_0 = arith.constant 0 : i32
    %2 = arith.cmpi ne, %1, %c0_i32_0 : i32
    scf.if %2 {
      %cst_12 = arith.constant 0.000000e+00 : f32
      %23 = vector.broadcast %cst_12 : f32 to vector<8x128xf32>
      %c0_13 = arith.constant 0 : index
      %c0_14 = arith.constant 0 : index
      %24 = vector.load %arg4[%c0_13, %c0_14] : memref<8x128xf32, #tpu.memory_space<vmem>>, vector<8x128xf32>
      tpu.vector_store %arg4[%c0_13, %c0_14], %23 {strides = array<i32>} : memref<8x128xf32, #tpu.memory_space<vmem>>, vector<8x128xf32>,
    } else {
    }
    %c0 = arith.constant 0 : index
    %c0_1 = arith.constant 0 : index
    %3 = vector.load %arg2[%c0, %c0_1] : memref<16x128xf32, #tpu.memory_space<vmem>>, vector<16x128xf32>
    %c0_2 = arith.constant 0 : index
    %c0_3 = arith.constant 0 : index
    %4 = vector.load %arg3[%c0_2, %c0_3] : memref<16x128xf32, #tpu.memory_space<vmem>>, vector<16x128xf32>
    %5 = math.log %3 : vector<16x128xf32>
    %cst = arith.constant -1.000000e+02 : f32
    %6 = vector.broadcast %cst : f32 to vector<16x128xf32>
    %7 = arith.maximumf %5, %6 : vector<16x128xf32>
    %cst_4 = arith.constant 1.000000e+00 : f32
    %8 = vector.broadcast %cst_4 : f32 to vector<16x128xf32>
    %9 = arith.subf %8, %3 : vector<16x128xf32>
    %10 = math.log %9 : vector<16x128xf32>
    %cst_5 = arith.constant -1.000000e+02 : f32
    %11 = vector.broadcast %cst_5 : f32 to vector<16x128xf32>
    %12 = arith.maximumf %10, %11 : vector<16x128xf32>
    %13 = arith.subf %7, %12 : vector<16x128xf32>
    %14 = arith.mulf %4, %13 : vector<16x128xf32>
    %15 = arith.addf %12, %14 : vector<16x128xf32>
    %cst_6 = arith.constant 0.000000e+00 : f32
    %16 = vector.broadcast %cst_6 : f32 to vector<16x128xf32>
    %17 = arith.subf %16, %15 : vector<16x128xf32>
    %c0_7 = arith.constant 0 : index
    %c0_8 = arith.constant 0 : index
    %18 = vector.load %arg4[%c0_7, %c0_8] : memref<8x128xf32, #tpu.memory_space<vmem>>, vector<1x128xf32>
    %cst_9 = arith.constant dense<0.000000e+00> : vector<128xf32>
    %19 = vector.multi_reduction <add>, %17, %cst_9 [0] : vector<16x128xf32> to vector<128xf32>
    %20 = vector.shape_cast %19 : vector<128xf32> to vector<1x128xf32>
    %21 = arith.addf %18, %20 : vector<1x128xf32>
    %c0_10 = arith.constant 0 : index
    %c0_11 = arith.constant 0 : index
    %22 = vector.load %arg4[%c0_10, %c0_11] : memref<8x128xf32, #tpu.memory_space<vmem>>, vector<1x128xf32>
    tpu.vector_store %arg4[%c0_10, %c0_11], %21 {strides = array<i32>} : memref<8x128xf32, #tpu.memory_space<vmem>>, vector<1x128xf32>,
    return
  }
  func.func @transform_0(%arg0: i32, %arg1: i32) -> (i32, i32) {
    %c1_i32 = arith.constant 1 : i32
    %0 = arith.muli %arg0, %c1_i32 : i32
    %1 = arith.addi %0, %arg1 : i32
    %c0_i32 = arith.constant 0 : i32
    %2 = arith.minsi %1, %c0_i32 : i32
    %c0_i32_0 = arith.constant 0 : i32
    %c0_i32_1 = arith.constant 0 : i32
    return %2, %c0_i32_0 : i32, i32
  }
  func.func @transform_1(%arg0: i32, %arg1: i32) -> (i32, i32) {
    %c1_i32 = arith.constant 1 : i32
    %0 = arith.muli %arg0, %c1_i32 : i32
    %1 = arith.addi %0, %arg1 : i32
    %c0_i32 = arith.constant 0 : i32
    %2 = arith.minsi %1, %c0_i32 : i32
    %c0_i32_0 = arith.constant 0 : i32
    %c0_i32_1 = arith.constant 0 : i32
    return %2, %c0_i32_0 : i32, i32
  }
  func.func @transform_2(%arg0: i32, %arg1: i32) -> (i32, i32) {
    %c0_i32 = arith.constant 0 : i32
    %c0_i32_0 = arith.constant 0 : i32
    return %arg0, %c0_i32 : i32, i32
  }
}

</mosaic_0001>

<llo_original>
// kernel: tpu_custom_call.1
$region0: #{tpu_custom_call.1}
  #allocation0 [shape = 'u32[]', space=smem, size = 0x4, offset = 0x4, fixed_abs, tag = 'smem constant byte address 0x4 - core index']
  #allocation1 [shape = 'u32[144,128]{1,0:T(1,128)}', space=vmem, size = 0x12000, scoped, tag = 'internal scratch']
  %s0 = inlined_call_operand.hbm [shape: f32[16,128], index: 0, kind: input, shape index: {}]
  %s1 = inlined_call_operand.hbm [shape: f32[16,128], index: 1, kind: input, shape index: {}]
  %s2 = inlined_call_operand.hbm [shape: f32[8,128], index: 2, kind: output, shape index: {}]
  %s3 = sld [smem:[#allocation0]]
  $region30: #{tpu_custom_call.1} parent=0
    _
  %s5 = ssub.s32 1, %s3
  %s6 = scalar_select 0, %s5, %s3
  $region1: #{tpu_custom_call.1} parent=0
    #allocation2 [shape = 'u8[8192]{0}', space=vmem, size = 0x2000, scoped, tag = 'input window, operand 0, single buffered']
    #allocation3 [shape = 's32[1]{0}', space=sflag, size = 0x4, scoped, tag = 'scoped memory for tpu_custom_call.1']
    #allocation4 [shape = 's32[1]{0}', space=sflag, size = 0x4, scoped, tag = 'scoped memory for tpu_custom_call.1']
    #allocation5 [shape = 'u8[8192]{0}', space=vmem, size = 0x2000, scoped, tag = 'input window, operand 1, single buffered']
    #allocation6 [shape = 's32[1]{0}', space=sflag, size = 0x4, scoped, tag = 'scoped memory for tpu_custom_call.1']
    #allocation7 [shape = 'u8[4096]{0}', space=vmem, size = 0x1000, scoped, tag = 'output window, operand 0, single buffered']
    %7 = vsyncpa [#allocation3], 0
    %8 = vsyncpa [#allocation6], 0
    %9 = vsyncpa [#allocation4], 0
    // Predicated region
    $region2: #{tpu_custom_call.1} parent=1 // pred_check
      _
    $region3: #{tpu_custom_call.1} parent=1 // pred_check_branch
      %11 = sbr.rel (0) target = $region5
    $region4: #{tpu_custom_call.1} parent=1 // pred_region
      %s12 = sadd.s32 0, 0
      %p13 = scmp.lt.s32.totalorder %s12, 0
      %s14 = scalar_select %p13, %s12, 0
      %s15 = smul.u32 2, %s14
      %s17 = ssub.s32 256, 256
      %18 = vsyncadd [#allocation3], %s17
      %s19 = smul.addr %s15, 128
      %s20 = scalar_lea.hbm %s0, %s19
      %s21 = sshll.u32 [#allocation2], 4
      %s22 = int_to_ptr.vmem [resolvable:$true] %s21
      %27 = dma.hbm_to_vmem [thread:$0]  %s20, 256, %s22, [#allocation3], 128, 128, 8
    $region5: #{tpu_custom_call.1} parent=1 // pred_fallthru
      _
    // Predicated region
    $region6: #{tpu_custom_call.1} parent=1 // pred_check
      _
    $region7: #{tpu_custom_call.1} parent=1 // pred_check_branch
      %29 = sbr.rel (0) target = $region9
    $region8: #{tpu_custom_call.1} parent=1 // pred_region
      %s30 = sadd.s32 0, 0
      %p31 = scmp.lt.s32.totalorder %s30, 0
      %s32 = scalar_select %p31, %s30, 0
      %s33 = smul.u32 2, %s32
      %s35 = ssub.s32 256, 256
      %36 = vsyncadd [#allocation6], %s35
      %s37 = smul.addr %s33, 128
      %s38 = scalar_lea.hbm %s1, %s37
      %s39 = sshll.u32 [#allocation5], 4
      %s40 = int_to_ptr.vmem [resolvable:$true] %s39
      %45 = dma.hbm_to_vmem [thread:$0]  %s38, 256, %s40, [#allocation6], 128, 128, 8
    $region9: #{tpu_custom_call.1} parent=1 // pred_fallthru
      _
    // Predicated region
    $region10: #{tpu_custom_call.1} parent=1 // pred_check
      _
    $region11: #{tpu_custom_call.1} parent=1 // pred_check_branch
      %47 = sbr.rel (0) target = $region13
    $region12: #{tpu_custom_call.1} parent=1 // pred_region
      %48 = dma.done [#allocation3], 256
    $region13: #{tpu_custom_call.1} parent=1 // pred_fallthru
      _
    // Predicated region
    $region14: #{tpu_custom_call.1} parent=1 // pred_check
      _
    $region15: #{tpu_custom_call.1} parent=1 // pred_check_branch
      %50 = sbr.rel (0) target = $region17
    $region16: #{tpu_custom_call.1} parent=1 // pred_region
      %51 = dma.done [#allocation6], 256
    $region17: #{tpu_custom_call.1} parent=1 // pred_fallthru
      _
    %s52 = sadd.s32 0, 0
    %p53 = scmp.lt.s32.totalorder %s52, 0
    %s54 = scalar_select %p53, %s52, 0
    %s55 = smul.u32 2, %s54
    %s56 = sadd.s32 0, 0
    %p57 = scmp.lt.s32.totalorder %s56, 0
    %s58 = scalar_select %p57, %s56, 0
    %s59 = smul.u32 2, %s58
    %p60 = scmp.eq.s32.totalorder 0, 0
    // Predicated region
    $region18: #{tpu_custom_call.1} parent=1 // pred_check
      %p61 = pneg %p60
    $region19: #{tpu_custom_call.1} parent=1 // pred_check_branch
      %63 = sbr.rel (%p61) target = $region21
    $region20: #{tpu_custom_call.1} parent=1 // pred_region
      %64 = vst [vmem:[#allocation7] sm:$0xff] 0.0
    $region21: #{tpu_custom_call.1} parent=1 // pred_fallthru
      _
    %v65 = vld [vmem:[#allocation2] sm:$0xff]
    %v66 = vld [vmem:[#allocation2 + $0x8] sm:$0xff]
    %v67 = vld [vmem:[#allocation5] sm:$0xff]
    %v68 = vld [vmem:[#allocation5 + $0x8] sm:$0xff]
    %v69 = vlog2.pop %v65
    %v70 = vmul.f32 %v69, 0.6931472
    %v71 = vlog2.pop %v66
    %v72 = vmul.f32 %v71, 0.6931472
    %v73 = vmax.f32 %v70, -100.0
    %v74 = vmax.f32 %v72, -100.0
    %v75 = vsub.f32 1.0, %v65
    %v76 = vsub.f32 1.0, %v66
    %v77 = vlog2.pop %v75
    %v78 = vmul.f32 %v77, 0.6931472
    %v79 = vlog2.pop %v76
    %v80 = vmul.f32 %v79, 0.6931472
    %v81 = vmax.f32 %v78, -100.0
    %v82 = vmax.f32 %v80, -100.0
    %v83 = vsub.f32 %v73, %v81
    %v84 = vsub.f32 %v74, %v82
    %v85 = vmul.f32 %v67, %v83
    %v86 = vmul.f32 %v68, %v84
    %v87 = vadd.f32 %v81, %v85
    %v88 = vadd.f32 %v82, %v86
    %v89 = vsub.f32 0.0, %v87
    %v90 = vsub.f32 0.0, %v88
    %v91 = vld [vmem:[#allocation7] sm:$0x1]
    %v92 = vadd.f32 %v89, %v90
    %v93 = vrot.slane %v92, 4
    %v94 = vadd.f32 %v92, %v93
    %v95 = vrot.slane %v94, 2
    %v96 = vadd.f32 %v94, %v95
    %v97 = vrot.slane %v96, 1
    %v98 = vadd.f32 %v96, %v97
    %v99 = vadd.f32 %v91, %v98
    %100 = vst [vmem:[#allocation7] sm:$0x1] %v99
    // Predicated region
    $region22: #{tpu_custom_call.1} parent=1 // pred_check
      _
    $region23: #{tpu_custom_call.1} parent=1 // pred_check_branch
      %102 = sbr.rel (0) target = $region25
    $region24: #{tpu_custom_call.1} parent=1 // pred_region
      %s104 = ssub.s32 128, 128
      %105 = vsyncadd [#allocation4], %s104
      %s107 = sshll.u32 [#allocation7], 4
      %s108 = int_to_ptr.vmem [resolvable:$true] %s107
      %110 = dma.vmem_to_hbm [thread:$0]  %s108, 128, %s2, [#allocation4]
    $region25: #{tpu_custom_call.1} parent=1 // pred_fallthru
      _
    // Predicated region
    $region26: #{tpu_custom_call.1} parent=1 // pred_check
      _
    $region27: #{tpu_custom_call.1} parent=1 // pred_check_branch
      %112 = sbr.rel (0) target = $region29
    $region28: #{tpu_custom_call.1} parent=1 // pred_region
      %113 = dma.done [#allocation4], 128
    $region29: #{tpu_custom_call.1} parent=1 // pred_fallthru
      _
    %114 = vsyncpa [#allocation3], 1
    %115 = vsyncpa [#allocation6], 1
    %116 = vsyncpa [#allocation4], 1

</llo_original>
